<compile_context>
chip_gen: v7x
topology: tpu7x:2x2x1
jax: 0.10.0
libtpu: 0.0.40
codegen_flags: <defaults>
</compile_context>

<pallas_src>
import functools
import math

import jax
import jax.numpy as jnp
from jax import lax
from jax.experimental import pallas as pl
from jax.experimental.pallas import tpu as pltpu


# Contract the embedding (last) dim of both operands: x @ y^T without an
# explicit transpose (canonical q @ k.T orientation on the MXU).
_CONTRACT_FEATURE = (((1,), (1,)), ((), ()))


def _contrastive_loss_kernel(p1_ref, p2_ref, out_ref,
                             zi_ref, zj_ref, bot_ref, pos_ref, tlog_ref,
                             *, temperature, block_rows, batch):
    """Two-pass kernel over a (2, num_tiles) grid.

    pass 0 (p == 0): normalize one streamed input tile, accumulate the sum of
        positives, store z * sqrt(1/t) into the resident z scratch.
    pass 1 (p == 1): compute the three gram blocks for one row tile against
        the full resident z, reduce them into the top-half running log-sum and
        the bottom-half lane-dense [1, B] accumulator, emit the loss on the
        last tile.
    """
    inv_t = jnp.float32(1.0 / temperature)
    sqrt_inv_t = jnp.float32(math.sqrt(1.0 / temperature))
    tiny = jnp.float32(1e-30)

    p = pl.program_id(0)                     # 0 = normalize pass, 1 = similarity pass
    t = pl.program_id(1)                     # row-tile index
    start = pl.multiple_of(t * block_rows, block_rows)

    @pl.when(jnp.logical_and(p == 0, t == 0))
    def _init():
        bot_ref[...] = jnp.zeros_like(bot_ref)
        pos_ref[...] = jnp.zeros_like(pos_ref)
        tlog_ref[...] = jnp.zeros_like(tlog_ref)

    # ---------------- pass 0: normalize one streamed input tile -------------
    @pl.when(p == 0)
    def _normalize_tile():
        p1 = p1_ref[...].astype(jnp.float32)
        p2 = p2_ref[...].astype(jnp.float32)
        eps2 = jnp.float32(1e-24)            # (1e-12)**2, same clamp as F.normalize
        zi32 = p1 * lax.rsqrt(jnp.maximum(jnp.sum(p1 * p1, axis=1, keepdims=True), eps2))
        zj32 = p2 * lax.rsqrt(jnp.maximum(jnp.sum(p2 * p2, axis=1, keepdims=True), eps2))

        # positives from the un-rounded f32 z; only their sum is needed.
        pos_ref[...] += jnp.sum(zi32 * zj32)

        # fold 1/temperature into the MXU inputs: gram blocks come out as S/t.
        zi_ref[pl.ds(start, block_rows), :] = (zi32 * sqrt_inv_t).astype(zi_ref.dtype)
        zj_ref[pl.ds(start, block_rows), :] = (zj32 * sqrt_inv_t).astype(zj_ref.dtype)

    # ---------------- pass 1: one streamed row tile of S/t ------------------
    @pl.when(p == 1)
    def _similarity_tile():
        zi_t = zi_ref[pl.ds(start, block_rows), :]        # [tr, D]
        zj_t = zj_ref[pl.ds(start, block_rows), :]
        zi_all = zi_ref[...]                              # [B, D], VMEM resident
        zj_all = zj_ref[...]

        # self-similarity mask for this tile: element (r, start + r).
        rows = lax.broadcasted_iota(jnp.int32, (block_rows, batch), 0) + start
        cols = lax.broadcasted_iota(jnp.int32, (block_rows, batch), 1)
        diag = rows == cols

        # One gram block at a time (produce -> exp -> reduce): small live set.
        a = lax.dot_general(zi_t, zi_all, _CONTRACT_FEATURE,
                            preferred_element_type=jnp.float32)       # [tr, B]
        ea = jnp.where(diag, 0.0, jnp.exp(a - inv_t))                 # diag removed at source
        row_top = jnp.sum(ea, axis=1, keepdims=True)                  # [tr, 1]

        bm = lax.dot_general(zi_t, zj_all, _CONTRACT_FEATURE,
                             preferred_element_type=jnp.float32)      # [tr, B]
        eb = jnp.exp(bm - inv_t)
        row_top = row_top + jnp.sum(eb, axis=1, keepdims=True)
        # lane-dense column sums (sublane reduce): no per-tile transpose/relayout.
        bot_ref[...] += jnp.sum(eb, axis=0, keepdims=True)            # [1, B]

        c = lax.dot_general(zj_t, zj_all, _CONTRACT_FEATURE,
                            preferred_element_type=jnp.float32)       # [tr, B]
        ec = jnp.where(diag, 0.0, jnp.exp(c - inv_t))
        # C is symmetric, so its masked column sums equal its masked row sums:
        # the whole bottom-half denominator stays in [1, B] orientation.
        bot_ref[...] += jnp.sum(ec, axis=0, keepdims=True)

        # top-half denominators are complete for this tile's rows: fold their
        # logs into a running scalar now (overlaps with later tiles' MXU work).
        tlog_ref[...] += jnp.sum(jnp.log(jnp.maximum(row_top, tiny)))

        # ------------------------------ epilogue ----------------------------
        @pl.when(t == pl.num_programs(1) - 1)
        def _epilogue():
            bot_logsum = jnp.sum(jnp.log(jnp.maximum(bot_ref[...], tiny)))
            # loss_k + loss_{k+B} = 2/t + log(D_top,k) + log(D_bot,k) - 2*pos_k/t
            total = (2.0 * batch * inv_t
                     + tlog_ref[...] + bot_logsum
                     - 2.0 * inv_t * pos_ref[...])
            out_ref[...] = total / (2.0 * batch)


def _pick_block_rows(b, matmul_dtype, max_rows=256):
    """Largest sublane-aligned divisor of b that is <= max_rows.

    v6e/v7x like 256-row tiles (pass max_rows=128 on v5e).  Falls back to a
    single full-batch tile — always a legal BlockSpec — when b has no aligned
    divisor <= max_rows.
    """
    if b <= max_rows:
        return b
    align = 8 * (4 // jnp.dtype(matmul_dtype).itemsize)   # 8 for f32, 16 for bf16
    for cand in range(max_rows, align - 1, -1):
        if b % cand == 0 and cand % align == 0:
            return cand
    for cand in range(max_rows, 7, -1):                   # 8-aligned fallback
        if b % cand == 0 and cand % 8 == 0:
            return cand
    # TODO(synk): pad the batch dim (masking the padded exp columns) for batch
    # sizes with no 8-aligned divisor instead of degrading to one giant tile.
    return b


def _auto_vmem_limit(b, d, block_rows, matmul_dtype):
    """Scoped-VMEM limit with headroom, derived from the actual working set."""
    z_bytes = 2 * b * d * jnp.dtype(matmul_dtype).itemsize       # resident z_i / z_j
    in_bytes = 2 * 2 * block_rows * d * 4                        # double-buffered input tiles
    acc_bytes = (b + 8) * 4 * 2                                  # [1,B] + scalar accumulators
    tmp_bytes = 4 * block_rows * b * 4                           # live [tr,B] f32 blocks (pass 1)
    est = z_bytes + in_bytes + acc_bytes + tmp_bytes
    limit = int(est * 1.25) + (4 << 20)
    limit = min(max(limit, 32 << 20), 96 << 20)
    try:   # cap below physical VMEM (64 MiB on v7x, 128 MiB on v5e/v6e)
        cap = getattr(pltpu.get_tpu_info(), "vmem_capacity_bytes", None)
        if cap:
            limit = min(limit, int(cap) - (8 << 20))
    except Exception:
        pass
    return max(limit, 16 << 20)


def contrastive_loss(proj_1, proj_2, temperature=0.5, *,
                     matmul_dtype=jnp.bfloat16, block_rows=None,
                     vmem_limit_bytes=None, max_rows=256):
    """SimCLR InfoNCE loss. proj_*: [batch, embedding_dim].

    matmul_dtype=bfloat16 (default) uses the fast MXU path with f32
    accumulation; pass jnp.float32 for bit-tighter results.  block_rows
    controls the streaming row-tile size (use max_rows=128 on v5e).
    """
    assert proj_1.shape == proj_2.shape and proj_1.ndim == 2
    b, d = proj_1.shape
    if block_rows is None:
        block_rows = _pick_block_rows(b, matmul_dtype, max_rows=max_rows)
    block_rows = int(block_rows)
    assert b % block_rows == 0, (b, block_rows)
    assert block_rows == b or block_rows % 8 == 0, (b, block_rows)
    num_tiles = b // block_rows

    if vmem_limit_bytes is None:
        vmem_limit_bytes = _auto_vmem_limit(b, d, block_rows, matmul_dtype)

    kernel = functools.partial(_contrastive_loss_kernel,
                               temperature=float(temperature),
                               block_rows=block_rows,
                               batch=int(b))

    # During pass 0, tile t of each input is streamed in; during pass 1 the
    # (unused) input block index is pinned to 0 so nothing is re-fetched.
    tile_spec = pl.BlockSpec((block_rows, d), lambda p, t: (t * (1 - p), 0))

    out = pl.pallas_call(
        kernel,
        out_shape=jax.ShapeDtypeStruct((1, 1), jnp.float32),
        grid_spec=pltpu.PrefetchScalarGridSpec(
            num_scalar_prefetch=0,
            grid=(2, num_tiles),                 # pass 0: normalize, pass 1: similarity
            in_specs=[tile_spec, tile_spec],
            out_specs=pl.BlockSpec((1, 1), lambda p, t: (0, 0)),
            scratch_shapes=[
                pltpu.VMEM((b, d), matmul_dtype),   # z_i * sqrt(1/t)
                pltpu.VMEM((b, d), matmul_dtype),   # z_j * sqrt(1/t)
                pltpu.VMEM((1, b), jnp.float32),    # bottom-half lane-dense colsums
                pltpu.VMEM((1, 1), jnp.float32),    # sum of positives
                pltpu.VMEM((1, 1), jnp.float32),    # running sum of top-half logs
            ]),
        compiler_params=pltpu.CompilerParams(
            dimension_semantics=("arbitrary", "arbitrary"),
            vmem_limit_bytes=int(vmem_limit_bytes)),
    )(proj_1, proj_2)
    return out[0, 0]


def _reference_loss(proj_1, proj_2, temperature=0.5):
    """Pure-JAX reference mirroring the PyTorch module (full f32 math)."""
    b = proj_1.shape[0]
    eps = 1e-12
    z_i = proj_1 / jnp.maximum(jnp.linalg.norm(proj_1, axis=1, keepdims=True), eps)
    z_j = proj_2 / jnp.maximum(jnp.linalg.norm(proj_2, axis=1, keepdims=True), eps)
    r = jnp.concatenate([z_i, z_j], axis=0)
    s = jnp.matmul(r, r.T, precision=jax.lax.Precision.HIGHEST)
    sim_ij = jnp.diagonal(s, offset=b)
    sim_ji = jnp.diagonal(s, offset=-b)
    positives = jnp.concatenate([sim_ij, sim_ji], axis=0)
    nominator = jnp.exp(positives / temperature)
    mask = 1.0 - jnp.eye(2 * b)
    denominator = jnp.sum(mask * jnp.exp(s / temperature), axis=1)
    all_losses = -jnp.log(nominator / denominator)
    return jnp.sum(all_losses) / (2 * b)


if __name__ == "__main__":
    temperature = 0.5
    key = jax.random.PRNGKey(0)
    k1, k2, k3, k4 = jax.random.split(key, 4)

    # Tiny shapes consistent with the module contract: [batch, embedding_dim].
    p1 = jax.random.normal(k1, (2, 32), dtype=jnp.float32)
    p2 = jax.random.normal(k2, (2, 32), dtype=jnp.float32)
    ref = _reference_loss(p1, p2, temperature)
    loss_f32 = jax.block_until_ready(
        contrastive_loss(p1, p2, temperature, matmul_dtype=jnp.float32))
    assert jnp.allclose(loss_f32, ref, rtol=2e-3, atol=2e-3), (loss_f32, ref)
    loss_bf16 = jax.block_until_ready(contrastive_loss(p1, p2, temperature))
    assert jnp.allclose(loss_bf16, ref, rtol=2e-2, atol=2e-2), (loss_bf16, ref)

    # Larger case exercising the multi-tile streaming path (2 row tiles).
    q1 = jax.random.normal(k3, (16, 32), dtype=jnp.float32)
    q2 = jax.random.normal(k4, (16, 32), dtype=jnp.float32)
    ref2 = _reference_loss(q1, q2, temperature)
    loss2 = jax.block_until_ready(
        contrastive_loss(q1, q2, temperature, matmul_dtype=jnp.float32, block_rows=8))
    assert jnp.allclose(loss2, ref2, rtol=2e-3, atol=2e-3), (loss2, ref2)

    # bf16-input MXU fast path (default), multi-tile; f32 accumulation.
    loss3 = jax.block_until_ready(
        contrastive_loss(q1, q2, temperature, block_rows=8))
    assert jnp.allclose(loss3, ref2, rtol=2e-2, atol=2e-2), (loss3, ref2)

    print("KERNEL_OK")
</pallas_src>

<mosaic_0001>
module attributes {stable_mosaic.version = 11 : i64} {
  func.func @_contrastive_loss_kernel(%arg0: i32, %arg1: i32, %arg2: memref<2x32xf32, #tpu.memory_space<vmem>>, %arg3: memref<2x32xf32, #tpu.memory_space<vmem>>, %arg4: memref<1x1xf32, #tpu.memory_space<vmem>>, %arg5: memref<2x32xf32, #tpu.memory_space<vmem>>, %arg6: memref<2x32xf32, #tpu.memory_space<vmem>>, %arg7: memref<1x2xf32, #tpu.memory_space<vmem>>, %arg8: memref<1x1xf32, #tpu.memory_space<vmem>>, %arg9: memref<1x1xf32, #tpu.memory_space<vmem>>) attributes {dimension_semantics = [#tpu.dimension_semantics<arbitrary>, #tpu.dimension_semantics<arbitrary>], iteration_bounds = array<i64: 2, 1>, scalar_prefetch = 0 : i64, scratch_operands = 5 : i64, tpu.core_type = #tpu.core_type<tc>, window_params = [{transform_indices = @transform_0, window_bounds = array<i64: 2, 32>}, {transform_indices = @transform_1, window_bounds = array<i64: 2, 32>}, {pipeline_mode = #tpu.pipeline_mode<synchronous>, transform_indices = @transform_2, window_bounds = array<i64: 1, 1>}]} {
    %c2_i32 = arith.constant 2 : i32
    %0 = arith.muli %arg1, %c2_i32 : i32
    %1 = tpu.assume_multiple %0, 2 : i32
    %c0_i32 = arith.constant 0 : i32
    %2 = arith.cmpi eq, %arg0, %c0_i32 : i32
    %c0_i32_0 = arith.constant 0 : i32
    %3 = arith.cmpi eq, %arg1, %c0_i32_0 : i32
    %4 = arith.andi %2, %3 : i1
    %5 = arith.extui %4 : i1 to i32
    %c0_i32_1 = arith.constant 0 : i32
    %6 = arith.cmpi ne, %5, %c0_i32_1 : i32
    scf.if %6 {
      %cst_7 = arith.constant 0.000000e+00 : f32
      %13 = vector.broadcast %cst_7 : f32 to vector<1x2xf32>
      %c0 = arith.constant 0 : index
      %c0_8 = arith.constant 0 : index
      %14 = vector.load %arg7[%c0, %c0_8] : memref<1x2xf32, #tpu.memory_space<vmem>>, vector<1x2xf32>
      tpu.vector_store %arg7[%c0, %c0_8], %13 {strides = array<i32>} : memref<1x2xf32, #tpu.memory_space<vmem>>, vector<1x2xf32>,
      %cst_9 = arith.constant 0.000000e+00 : f32
      %15 = vector.broadcast %cst_9 : f32 to vector<1x1xf32>
      %c0_10 = arith.constant 0 : index
      %c0_11 = arith.constant 0 : index
      %16 = vector.load %arg8[%c0_10, %c0_11] : memref<1x1xf32, #tpu.memory_space<vmem>>, vector<1x1xf32>
      tpu.vector_store %arg8[%c0_10, %c0_11], %15 {strides = array<i32>} : memref<1x1xf32, #tpu.memory_space<vmem>>, vector<1x1xf32>,
      %cst_12 = arith.constant 0.000000e+00 : f32
      %17 = vector.broadcast %cst_12 : f32 to vector<1x1xf32>
      %c0_13 = arith.constant 0 : index
      %c0_14 = arith.constant 0 : index
      %18 = vector.load %arg9[%c0_13, %c0_14] : memref<1x1xf32, #tpu.memory_space<vmem>>, vector<1x1xf32>
      tpu.vector_store %arg9[%c0_13, %c0_14], %17 {strides = array<i32>} : memref<1x1xf32, #tpu.memory_space<vmem>>, vector<1x1xf32>,
    } else {
    }
    %c0_i32_2 = arith.constant 0 : i32
    %7 = arith.cmpi eq, %arg0, %c0_i32_2 : i32
    %8 = arith.extui %7 : i1 to i32
    %cst = arith.constant 1.41421354 : f32
    %c0_i32_3 = arith.constant 0 : i32
    %9 = arith.cmpi ne, %8, %c0_i32_3 : i32
    scf.if %9 {
      %c0 = arith.constant 0 : index
      %c0_7 = arith.constant 0 : index
      %13 = vector.load %arg2[%c0, %c0_7] : memref<2x32xf32, #tpu.memory_space<vmem>>, vector<2x32xf32>
      %c0_8 = arith.constant 0 : index
      %c0_9 = arith.constant 0 : index
      %14 = vector.load %arg3[%c0_8, %c0_9] : memref<2x32xf32, #tpu.memory_space<vmem>>, vector<2x32xf32>
      %15 = arith.mulf %13, %13 : vector<2x32xf32>
      %cst_10 = arith.constant dense<0.000000e+00> : vector<2xf32>
      %16 = vector.multi_reduction <add>, %15, %cst_10 [1] : vector<2x32xf32> to vector<2xf32>
      %17 = vector.shape_cast %16 : vector<2xf32> to vector<2x1xf32>
      %cst_11 = arith.constant 1.000000e-24 : f32
      %18 = vector.broadcast %cst_11 : f32 to vector<2x1xf32>
      %19 = arith.maximumf %17, %18 : vector<2x1xf32>
      %20 = math.rsqrt %19 : vector<2x1xf32>
      %21 = vector.broadcast %20 : vector<2x1xf32> to vector<2x32xf32>
      %22 = arith.mulf %13, %21 : vector<2x32xf32>
      %23 = arith.mulf %14, %14 : vector<2x32xf32>
      %cst_12 = arith.constant dense<0.000000e+00> : vector<2xf32>
      %24 = vector.multi_reduction <add>, %23, %cst_12 [1] : vector<2x32xf32> to vector<2xf32>
      %25 = vector.shape_cast %24 : vector<2xf32> to vector<2x1xf32>
      %cst_13 = arith.constant 1.000000e-24 : f32
      %26 = vector.broadcast %cst_13 : f32 to vector<2x1xf32>
      %27 = arith.maximumf %25, %26 : vector<2x1xf32>
      %28 = math.rsqrt %27 : vector<2x1xf32>
      %29 = vector.broadcast %28 : vector<2x1xf32> to vector<2x32xf32>
      %30 = arith.mulf %14, %29 : vector<2x32xf32>
      %c0_14 = arith.constant 0 : index
      %c0_15 = arith.constant 0 : index
      %31 = vector.load %arg8[%c0_14, %c0_15] : memref<1x1xf32, #tpu.memory_space<vmem>>, vector<1x1xf32>
      %32 = arith.mulf %22, %30 : vector<2x32xf32>
      %33 = vector.shape_cast %32 : vector<2x32xf32> to vector<1x2x32xf32>
      %cst_16 = arith.constant dense<0.000000e+00> : vector<1xf32>
      %34 = vector.multi_reduction <add>, %33, %cst_16 [1, 2] : vector<1x2x32xf32> to vector<1xf32>
      %35 = vector.shape_cast %34 : vector<1xf32> to vector<1x1x1xf32>
      %36 = vector.extract %35[0, 0, 0] : f32 from vector<1x1x1xf32>
      %37 = vector.broadcast %36 : f32 to vector<1x1xf32>
      %38 = arith.addf %31, %37 : vector<1x1xf32>
      %c0_17 = arith.constant 0 : index
      %c0_18 = arith.constant 0 : index
      %39 = vector.load %arg8[%c0_17, %c0_18] : memref<1x1xf32, #tpu.memory_space<vmem>>, vector<1x1xf32>
      tpu.vector_store %arg8[%c0_17, %c0_18], %38 {strides = array<i32>} : memref<1x1xf32, #tpu.memory_space<vmem>>, vector<1x1xf32>,
      %40 = vector.broadcast %cst : f32 to vector<2x32xf32>
      %41 = arith.mulf %22, %40 : vector<2x32xf32>
      %42 = arith.index_cast %1 : i32 to index
      %c0_19 = arith.constant 0 : index
      %43 = vector.load %arg5[%42, %c0_19] : memref<2x32xf32, #tpu.memory_space<vmem>>, vector<2x32xf32>
      tpu.vector_store %arg5[%42, %c0_19], %41 {strides = array<i32>} : memref<2x32xf32, #tpu.memory_space<vmem>>, vector<2x32xf32>,
      %44 = vector.broadcast %cst : f32 to vector<2x32xf32>
      %45 = arith.mulf %30, %44 : vector<2x32xf32>
      %46 = arith.index_cast %1 : i32 to index
      %c0_20 = arith.constant 0 : index
      %47 = vector.load %arg6[%46, %c0_20] : memref<2x32xf32, #tpu.memory_space<vmem>>, vector<2x32xf32>
      tpu.vector_store %arg6[%46, %c0_20], %45 {strides = array<i32>} : memref<2x32xf32, #tpu.memory_space<vmem>>, vector<2x32xf32>,
    } else {
    }
    %c1_i32 = arith.constant 1 : i32
    %10 = arith.cmpi eq, %arg0, %c1_i32 : i32
    %11 = arith.extui %10 : i1 to i32
    %cst_4 = arith.constant 2.000000e+00 : f32
    %cst_5 = arith.constant 1.000000e-30 : f32
    %c0_i32_6 = arith.constant 0 : i32
    %12 = arith.cmpi ne, %11, %c0_i32_6 : i32
    scf.if %12 {
      %13 = arith.index_cast %1 : i32 to index
      %c0 = arith.constant 0 : index
      %14 = vector.load %arg5[%13, %c0] : memref<2x32xf32, #tpu.memory_space<vmem>>, vector<2x32xf32>
      %15 = arith.index_cast %1 : i32 to index
      %c0_7 = arith.constant 0 : index
      %16 = vector.load %arg6[%15, %c0_7] : memref<2x32xf32, #tpu.memory_space<vmem>>, vector<2x32xf32>
      %c0_8 = arith.constant 0 : index
      %c0_9 = arith.constant 0 : index
      %17 = vector.load %arg5[%c0_8, %c0_9] : memref<2x32xf32, #tpu.memory_space<vmem>>, vector<2x32xf32>
      %c0_10 = arith.constant 0 : index
      %c0_11 = arith.constant 0 : index
      %18 = vector.load %arg6[%c0_10, %c0_11] : memref<2x32xf32, #tpu.memory_space<vmem>>, vector<2x32xf32>
      %19 = tpu.iota {dimensions = array<i32: 0>} : vector<2x2xi32>
      %20 = vector.broadcast %1 : i32 to vector<2x2xi32>
      %21 = arith.addi %19, %20 : vector<2x2xi32>
      %22 = tpu.iota {dimensions = array<i32: 1>} : vector<2x2xi32>
      %23 = arith.cmpi eq, %21, %22 : vector<2x2xi32>
      %cst_12 = arith.constant dense<0.000000e+00> : vector<2x2xf32>
      %24 = tpu.matmul %14, %17, %cst_12 {dimension_numbers = #tpu.dot_dimension_numbers<[1], [1], [0], [0], [0, 0, 1, 0], [], []>} : vector<2x32xf32>, vector<2x32xf32>, vector<2x2xf32> -> vector<2x2xf32>
      %25 = vector.broadcast %cst_4 : f32 to vector<2x2xf32>
      %26 = arith.subf %24, %25 : vector<2x2xf32>
      %27 = math.exp %26 : vector<2x2xf32>
      %cst_13 = arith.constant 0.000000e+00 : f32
      %28 = vector.broadcast %cst_13 : f32 to vector<2x2xf32>
      %29 = arith.select %23, %28, %27 : vector<2x2xi1>, vector<2x2xf32>
      %cst_14 = arith.constant dense<0.000000e+00> : vector<2xf32>
      %30 = vector.multi_reduction <add>, %29, %cst_14 [1] : vector<2x2xf32> to vector<2xf32>
      %31 = vector.shape_cast %30 : vector<2xf32> to vector<2x1xf32>
      %cst_15 = arith.constant dense<0.000000e+00> : vector<2x2xf32>
      %32 = tpu.matmul %14, %18, %cst_15 {dimension_numbers = #tpu.dot_dimension_numbers<[1], [1], [0], [0], [0, 0, 1, 0], [], []>} : vector<2x32xf32>, vector<2x32xf32>, vector<2x2xf32> -> vector<2x2xf32>
      %33 = vector.broadcast %cst_4 : f32 to vector<2x2xf32>
      %34 = arith.subf %32, %33 : vector<2x2xf32>
      %35 = math.exp %34 : vector<2x2xf32>
      %cst_16 = arith.constant dense<0.000000e+00> : vector<2xf32>
      %36 = vector.multi_reduction <add>, %35, %cst_16 [1] : vector<2x2xf32> to vector<2xf32>
      %37 = vector.shape_cast %36 : vector<2xf32> to vector<2x1xf32>
      %38 = arith.addf %31, %37 : vector<2x1xf32>
      %c0_17 = arith.constant 0 : index
      %c0_18 = arith.constant 0 : index
      %39 = vector.load %arg7[%c0_17, %c0_18] : memref<1x2xf32, #tpu.memory_space<vmem>>, vector<1x2xf32>
      %cst_19 = arith.constant dense<0.000000e+00> : vector<2xf32>
      %40 = vector.multi_reduction <add>, %35, %cst_19 [0] : vector<2x2xf32> to vector<2xf32>
      %41 = vector.shape_cast %40 : vector<2xf32> to vector<1x2xf32>
      %42 = arith.addf %39, %41 : vector<1x2xf32>
      %c0_20 = arith.constant 0 : index
      %c0_21 = arith.constant 0 : index
      %43 = vector.load %arg7[%c0_20, %c0_21] : memref<1x2xf32, #tpu.memory_space<vmem>>, vector<1x2xf32>
      tpu.vector_store %arg7[%c0_20, %c0_21], %42 {strides = array<i32>} : memref<1x2xf32, #tpu.memory_space<vmem>>, vector<1x2xf32>,
      %cst_22 = arith.constant dense<0.000000e+00> : vector<2x2xf32>
      %44 = tpu.matmul %16, %18, %cst_22 {dimension_numbers = #tpu.dot_dimension_numbers<[1], [1], [0], [0], [0, 0, 1, 0], [], []>} : vector<2x32xf32>, vector<2x32xf32>, vector<2x2xf32> -> vector<2x2xf32>
      %45 = vector.broadcast %cst_4 : f32 to vector<2x2xf32>
      %46 = arith.subf %44, %45 : vector<2x2xf32>
      %47 = math.exp %46 : vector<2x2xf32>
      %cst_23 = arith.constant 0.000000e+00 : f32
      %48 = vector.broadcast %cst_23 : f32 to vector<2x2xf32>
      %49 = arith.select %23, %48, %47 : vector<2x2xi1>, vector<2x2xf32>
      %c0_24 = arith.constant 0 : index
      %c0_25 = arith.constant 0 : index
      %50 = vector.load %arg7[%c0_24, %c0_25] : memref<1x2xf32, #tpu.memory_space<vmem>>, vector<1x2xf32>
      %cst_26 = arith.constant dense<0.000000e+00> : vector<2xf32>
      %51 = vector.multi_reduction <add>, %49, %cst_26 [0] : vector<2x2xf32> to vector<2xf32>
      %52 = vector.shape_cast %51 : vector<2xf32> to vector<1x2xf32>
      %53 = arith.addf %50, %52 : vector<1x2xf32>
      %c0_27 = arith.constant 0 : index
      %c0_28 = arith.constant 0 : index
      %54 = vector.load %arg7[%c0_27, %c0_28] : memref<1x2xf32, #tpu.memory_space<vmem>>, vector<1x2xf32>
      tpu.vector_store %arg7[%c0_27, %c0_28], %53 {strides = array<i32>} : memref<1x2xf32, #tpu.memory_space<vmem>>, vector<1x2xf32>,
      %c0_29 = arith.constant 0 : index
      %c0_30 = arith.constant 0 : index
      %55 = vector.load %arg9[%c0_29, %c0_30] : memref<1x1xf32, #tpu.memory_space<vmem>>, vector<1x1xf32>
      %56 = vector.broadcast %cst_5 : f32 to vector<2x1xf32>
      %57 = arith.maximumf %38, %56 : vector<2x1xf32>
      %58 = math.log %57 : vector<2x1xf32>
      %59 = vector.shape_cast %58 : vector<2x1xf32> to vector<1x2x1xf32>
      %cst_31 = arith.constant dense<0.000000e+00> : vector<1xf32>
      %60 = vector.multi_reduction <add>, %59, %cst_31 [1, 2] : vector<1x2x1xf32> to vector<1xf32>
      %61 = vector.shape_cast %60 : vector<1xf32> to vector<1x1x1xf32>
      %62 = vector.extract %61[0, 0, 0] : f32 from vector<1x1x1xf32>
      %63 = vector.broadcast %62 : f32 to vector<1x1xf32>
      %64 = arith.addf %55, %63 : vector<1x1xf32>
      %c0_32 = arith.constant 0 : index
      %c0_33 = arith.constant 0 : index
      %65 = vector.load %arg9[%c0_32, %c0_33] : memref<1x1xf32, #tpu.memory_space<vmem>>, vector<1x1xf32>
      tpu.vector_store %arg9[%c0_32, %c0_33], %64 {strides = array<i32>} : memref<1x1xf32, #tpu.memory_space<vmem>>, vector<1x1xf32>,
      %c0_i32_34 = arith.constant 0 : i32
      %66 = arith.cmpi eq, %arg1, %c0_i32_34 : i32
      %67 = arith.extui %66 : i1 to i32
      %c0_i32_35 = arith.constant 0 : i32
      %68 = arith.cmpi ne, %67, %c0_i32_35 : i32
      scf.if %68 {
        %c0_36 = arith.constant 0 : index
        %c0_37 = arith.constant 0 : index
        %69 = vector.load %arg7[%c0_36, %c0_37] : memref<1x2xf32, #tpu.memory_space<vmem>>, vector<1x2xf32>
        %70 = vector.broadcast %cst_5 : f32 to vector<1x2xf32>
        %71 = arith.maximumf %69, %70 : vector<1x2xf32>
        %72 = math.log %71 : vector<1x2xf32>
        %73 = vector.shape_cast %72 : vector<1x2xf32> to vector<1x1x2xf32>
        %cst_38 = arith.constant dense<0.000000e+00> : vector<1xf32>
        %74 = vector.multi_reduction <add>, %73, %cst_38 [1, 2] : vector<1x1x2xf32> to vector<1xf32>
        %75 = vector.shape_cast %74 : vector<1xf32> to vector<1x1x1xf32>
        %76 = vector.extract %75[0, 0, 0] : f32 from vector<1x1x1xf32>
        %cst_39 = arith.constant 4.000000e+00 : f32
        %77 = arith.mulf %cst_39, %cst_4 : f32
        %c0_40 = arith.constant 0 : index
        %c0_41 = arith.constant 0 : index
        %78 = vector.load %arg9[%c0_40, %c0_41] : memref<1x1xf32, #tpu.memory_space<vmem>>, vector<1x1xf32>
        %79 = vector.broadcast %77 : f32 to vector<1x1xf32>
        %80 = arith.addf %79, %78 : vector<1x1xf32>
        %81 = vector.broadcast %76 : f32 to vector<1x1xf32>
        %82 = arith.addf %80, %81 : vector<1x1xf32>
        %cst_42 = arith.constant 2.000000e+00 : f32
        %83 = arith.mulf %cst_42, %cst_4 : f32
        %c0_43 = arith.constant 0 : index
        %c0_44 = arith.constant 0 : index
        %84 = vector.load %arg8[%c0_43, %c0_44] : memref<1x1xf32, #tpu.memory_space<vmem>>, vector<1x1xf32>
        %85 = vector.broadcast %83 : f32 to vector<1x1xf32>
        %86 = arith.mulf %85, %84 : vector<1x1xf32>
        %87 = arith.subf %82, %86 : vector<1x1xf32>
        %cst_45 = arith.constant 4.000000e+00 : f32
        %88 = vector.broadcast %cst_45 : f32 to vector<1x1xf32>
        %89 = arith.divf %87, %88 : vector<1x1xf32>
        %c0_46 = arith.constant 0 : index
        %c0_47 = arith.constant 0 : index
        %90 = vector.load %arg4[%c0_46, %c0_47] : memref<1x1xf32, #tpu.memory_space<vmem>>, vector<1x1xf32>
        tpu.vector_store %arg4[%c0_46, %c0_47], %89 {strides = array<i32>} : memref<1x1xf32, #tpu.memory_space<vmem>>, vector<1x1xf32>,
      } else {
      }
    } else {
    }
    return
  }
  func.func @transform_0(%arg0: i32, %arg1: i32) -> (i32, i32) {
    %c1_i32 = arith.constant 1 : i32
    %0 = arith.subi %c1_i32, %arg0 : i32
    %1 = arith.muli %arg1, %0 : i32
    %c0_i32 = arith.constant 0 : i32
    %c0_i32_0 = arith.constant 0 : i32
    return %1, %c0_i32 : i32, i32
  }
  func.func @transform_1(%arg0: i32, %arg1: i32) -> (i32, i32) {
    %c1_i32 = arith.constant 1 : i32
    %0 = arith.subi %c1_i32, %arg0 : i32
    %1 = arith.muli %arg1, %0 : i32
    %c0_i32 = arith.constant 0 : i32
    %c0_i32_0 = arith.constant 0 : i32
    return %1, %c0_i32 : i32, i32
  }
  func.func @transform_2(%arg0: i32, %arg1: i32) -> (i32, i32) {
    %c0_i32 = arith.constant 0 : i32
    %c0_i32_0 = arith.constant 0 : i32
    %c0_i32_1 = arith.constant 0 : i32
    return %c0_i32, %c0_i32_0 : i32, i32
  }
}

</mosaic_0001>

<llo_original>
// kernel: tpu_custom_call.1
$region0: #{tpu_custom_call.1}
  #allocation0 [shape = 'u32[]', space=smem, size = 0x4, offset = 0x4, fixed_abs, tag = 'smem constant byte address 0x4 - core index']
  #allocation1 [shape = 'u32[144,128]{1,0:T(1,128)}', space=vmem, size = 0x12000, scoped, tag = 'internal scratch']
  #allocation2 [shape = 'f32[2,32]{1,0:T(2,128)}', space=vmem, size = 0x400, scoped, tag = 'scratch operand']
  #allocation3 [shape = 'f32[2,32]{1,0:T(2,128)}', space=vmem, size = 0x400, scoped, tag = 'scratch operand']
  #allocation4 [shape = 'f32[1,2]{1,0:T(1,128)}', space=vmem, size = 0x200, scoped, tag = 'scratch operand']
  #allocation5 [shape = 'f32[1,1]{1,0:T(1,128)}', space=vmem, size = 0x200, scoped, tag = 'scratch operand']
  #allocation6 [shape = 'f32[1,1]{1,0:T(1,128)}', space=vmem, size = 0x200, scoped, tag = 'scratch operand']
  %s0 = inlined_call_operand.hbm [shape: f32[2,32], index: 0, kind: input, shape index: {}]
  %s1 = inlined_call_operand.vmem [shape: f32[2,32], index: 1, kind: input, shape index: {}]
  %s2 = inlined_call_operand.hbm [shape: f32[1,1], index: 2, kind: output, shape index: {}]
  %s3 = sld [smem:[#allocation0]]
  $region61: #{tpu_custom_call.1} parent=0
    _
  %s5 = ssub.s32 1, %s3
  %s6 = scalar_select 0, %s5, %s3
  $region1: #{tpu_custom_call.1} parent=0
    #allocation7 [shape = 'u8[2048]{0}', space=vmem, size = 0x800, scoped, tag = 'input window, operand 0']
    #allocation8 [shape = 's32[2]{0}', space=sflag, size = 0x8, scoped, tag = 'scoped memory for tpu_custom_call.1']
    #allocation9 [shape = 's32[2]{0}', space=sflag, size = 0x8, scoped, tag = 'scoped memory for tpu_custom_call.1']
    #allocation10 [shape = 'u8[512]{0}', space=vmem, size = 0x400, scoped, tag = 'output window, operand 0, single buffered']
    %7 = vsyncpa [#allocation8], 0
    %s8 = scalar_lea.sflag [#allocation8], 1
    %9 = vsyncpa %s8, 0
    %10 = vsyncpa [#allocation9], 0
    loop: start=0, step=1, limit=4
    $region2: #{tpu_custom_call.1} parent=1 // loop_pre_header
      _
    $region3: #{tpu_custom_call.1} parent=1 // loop_header
      %s12 = sphi 0, %s16
      %p13 = scmp.ge.s32.totalorder %s12, 4
      %s19 = sphi 0, %s31
      %s20 = sphi 0, %s27
      %s21 = sphi 0, %s19
      %s22 = sphi 0, %s20
      %s23 = sphi 0, %s21
      %s24 = sphi 0, %s22
      %s38 = sphi 0, %s40
      %s41 = sphi 0, %s38
      %s42 = sphi 0, %s41
      %s58 = sphi 0, %s42
      %s68 = sphi 0, %s70
      %s71 = sphi 0, %s68
      %s72 = sphi 0, %s71
      %s88 = sphi 0, %s72
      %s92 = sphi 0, %s92
      %s94 = sphi 0, %s92
      %s95 = sphi 0, %s94
      %s109 = sphi 0, %s95
    $region4: #{tpu_custom_call.1} parent=1 // loop_header_branch
      %15 = sbr.rel (%p13) target = $region8
    $region5: #{tpu_custom_call.1} parent=1 // loop_body
      %s17 = ssub.s32 %s12, 1
      %s18 = ssub.s32 %s12, 2
      %s25 = sadd.s32 1, %s20
      %p26 = scmp.ge.s32.totalorder %s25, 1
      %s27 = scalar_select %p26, 0, %s25
      %s28 = sadd.s32 1, %s19
      %s29 = scalar_select %p26, %s28, %s19
      %p30 = scmp.ge.s32.totalorder %s29, 2
      %s31 = scalar_select %p30, 0, %s29
      %s32 = ssub.s32 1, %s19
      %s33 = smul.u32 %s20, %s32
      %s34 = ssub.s32 1, %s31
      %s35 = smul.u32 %s27, %s34
      %s36 = ssub.s32 %s33, %s35
      %p37 = scmp.eq.s32.totalorder %s36, 0
      %s39 = sadd.s32 %s38, 1
      %s40 = scalar_select %p37, %s38, %s39
      %p43 = pneg %p37
      %p44 = scmp.eq.s32.totalorder %s12, 1
      %p45 = por %p43, %p44
      %p46 = scmp.ne.s32.totalorder %s38, %s41
      %p47 = scmp.eq.s32.totalorder %s12, 0
      %p48 = por %p46, %p47
      %p49 = scmp.ne.s32.totalorder %s38, %s41
      %p50 = scmp.eq.s32.totalorder %s17, 1
      %p51 = por %p49, %p50
      %p52 = scmp.ne.s32.totalorder %s41, %s42
      %p53 = scmp.eq.s32.totalorder %s17, 0
      %p54 = por %p52, %p53
      %p55 = scmp.ne.s32.totalorder %s41, %s42
      %p56 = scmp.eq.s32.totalorder %s18, 1
      %p57 = por %p55, %p56
      %p59 = scmp.ne.s32.totalorder %s42, %s58
      %p60 = scmp.eq.s32.totalorder %s18, 0
      %p61 = por %p59, %p60
      %s62 = ssub.s32 1, %s19
      %s63 = smul.u32 %s20, %s62
      %s64 = ssub.s32 1, %s31
      %s65 = smul.u32 %s27, %s64
      %s66 = ssub.s32 %s63, %s65
      %p67 = scmp.eq.s32.totalorder %s66, 0
      %s69 = sadd.s32 %s68, 1
      %s70 = scalar_select %p67, %s68, %s69
      %p73 = pneg %p67
      %p74 = scmp.eq.s32.totalorder %s12, 1
      %p75 = por %p73, %p74
      %p76 = scmp.ne.s32.totalorder %s68, %s71
      %p77 = scmp.eq.s32.totalorder %s12, 0
      %p78 = por %p76, %p77
      %p79 = scmp.ne.s32.totalorder %s68, %s71
      %p80 = scmp.eq.s32.totalorder %s17, 1
      %p81 = por %p79, %p80
      %p82 = scmp.ne.s32.totalorder %s71, %s72
      %p83 = scmp.eq.s32.totalorder %s17, 0
      %p84 = por %p82, %p83
      %p85 = scmp.ne.s32.totalorder %s71, %s72
      %p86 = scmp.eq.s32.totalorder %s18, 1
      %p87 = por %p85, %p86
      %p89 = scmp.ne.s32.totalorder %s72, %s88
      %p90 = scmp.eq.s32.totalorder %s18, 0
      %p91 = por %p89, %p90
      %s93 = sadd.s32 %s92, 1
      %p96 = scmp.eq.s32.totalorder %s12, 1
      %p97 = scmp.ne.s32.totalorder %s92, %s94
      %p98 = scmp.eq.s32.totalorder %s12, 0
      %p99 = por %p97, %p98
      %p100 = scmp.ne.s32.totalorder %s92, %s94
      %p101 = scmp.eq.s32.totalorder %s17, 1
      %p102 = por %p100, %p101
      %p103 = scmp.ne.s32.totalorder %s94, %s95
      %p104 = scmp.eq.s32.totalorder %s17, 0
      %p105 = por %p103, %p104
      %p106 = scmp.ne.s32.totalorder %s94, %s95
      %p107 = scmp.eq.s32.totalorder %s18, 1
      %p108 = por %p106, %p107
      %p110 = scmp.ne.s32.totalorder %s95, %s109
      %p111 = scmp.eq.s32.totalorder %s18, 0
      %p112 = por %p110, %p111
      %p113 = scmp.le.s32.totalorder 1, %s12
      %p114 = scmp.lt.s32.totalorder %s12, 3
      %p115 = pnand %p113, %p114
      %p116 = pneg %p115
      // Predicated region
      $region9: #{tpu_custom_call.1} parent=5 // pred_check
        _
      $region10: #{tpu_custom_call.1} parent=5 // pred_check_branch
        %118 = sbr.rel (%p115) target = $region12
      $region11: #{tpu_custom_call.1} parent=5 // pred_region
        %s119 = ssub.s32 %s12, 1
      $region12: #{tpu_custom_call.1} parent=5 // pred_fallthru
        _
      %p120 = scmp.lt.s32.totalorder %s12, 2
      // Predicated region
      $region13: #{tpu_custom_call.1} parent=5 // pred_check
        %p121 = pneg %p120
      $region14: #{tpu_custom_call.1} parent=5 // pred_check_branch
        %123 = sbr.rel (%p121) target = $region16
      $region15: #{tpu_custom_call.1} parent=5 // pred_region
        // Predicated region
        $region17: #{tpu_custom_call.1} parent=15 // pred_check
          %p124 = pneg %p48
        $region18: #{tpu_custom_call.1} parent=15 // pred_check_branch
          %126 = sbr.rel (%p124) target = $region20
        $region19: #{tpu_custom_call.1} parent=15 // pred_region
          %s127 = sand.u32 %s38, 1
          %s128 = scalar_lea.sflag [#allocation8], %s127
          %s129 = sand.u32 %s38, 1
          %s130 = smul.addr %s129, 2
          %s131 = scalar_lea.vmem [#allocation7], %s130
          %s132 = ssub.s32 1, %s19
          %s133 = smul.u32 %s20, %s132
          %s135 = ssub.s32 32, 32
          %136 = vsyncadd %s128, %s135
          %s137 = smul.addr %s133, 32
          %s138 = scalar_lea.hbm %s0, %s137
          %s140 = sshll.u32 %s131, 4
          %s141 = int_to_ptr.vmem [resolvable:$true] %s140
          %143 = dma.hbm_to_vmem [thread:$0]  %s138, 32, %s141, %s128
        $region20: #{tpu_custom_call.1} parent=15 // pred_fallthru
          _
        // Predicated region
        $region21: #{tpu_custom_call.1} parent=15 // pred_check
          %p144 = pneg %p78
        $region22: #{tpu_custom_call.1} parent=15 // pred_check_branch
          %146 = sbr.rel (%p144) target = $region24
        $region23: #{tpu_custom_call.1} parent=15 // pred_region
          %s147 = ssub.s32 1, %s19
          %s148 = smul.u32 %s20, %s147
          %p149 = scmp.lt.s32.totalorder %s148, 0
          %s150 = scalar_select %p149, %s148, 0
          %s151 = smul.addr %s150, 2
          %s152 = scalar_lea.vmem %s1, %s151
          %s153 = ssub.s32 1, %s19
          %s154 = smul.u32 %s20, %s153
        $region24: #{tpu_custom_call.1} parent=15 // pred_fallthru
          _
      $region16: #{tpu_custom_call.1} parent=5 // pred_fallthru
        _
      %p155 = scmp.le.s32.totalorder 1, %s12
      %p156 = scmp.lt.s32.totalorder %s12, 3
      %p157 = pnand %p155, %p156
      %p158 = pneg %p157
      // Predicated region
      $region25: #{tpu_custom_call.1} parent=5 // pred_check
        _
      $region26: #{tpu_custom_call.1} parent=5 // pred_check_branch
        %160 = sbr.rel (%p157) target = $region28
      $region27: #{tpu_custom_call.1} parent=5 // pred_region
        %s161 = ssub.s32 %s12, 1
        %s162 = sand.u32 %s41, 1
        %s163 = scalar_lea.sflag [#allocation8], %s162
        %s164 = sand.u32 %s41, 1
        %s165 = smul.addr %s164, 2
        %s166 = scalar_lea.vmem [#allocation7], %s165
        // Predicated region
        $region29: #{tpu_custom_call.1} parent=27 // pred_check
          %p167 = pneg %p54
        $region30: #{tpu_custom_call.1} parent=27 // pred_check_branch
          %169 = sbr.rel (%p167) target = $region32
        $region31: #{tpu_custom_call.1} parent=27 // pred_region
          %170 = dma.done %s163, 32
        $region32: #{tpu_custom_call.1} parent=27 // pred_fallthru
          _
        %s171 = sand.u32 %s41, 1
        %s172 = scalar_lea.sflag [#allocation8], %s171
        %s173 = sand.u32 %s41, 1
        %s174 = smul.addr %s173, 2
        %s175 = scalar_lea.vmem [#allocation7], %s174
        %p176 = pneg %p54
        %p177 = pneg %p51
        %s178 = ssub.s32 1, %s21
        %s179 = smul.u32 %s22, %s178
        %p180 = scmp.lt.s32.totalorder %s179, 0
        %s181 = scalar_select %p180, %s179, 0
        %s182 = smul.addr %s181, 2
        %s183 = scalar_lea.vmem %s1, %s182
        %p184 = pneg %p84
        %p185 = pneg %p81
        %p186 = pneg %p105
        %p187 = pneg %p102
        %s188 = ssub.s32 1, %s21
        %s189 = smul.u32 %s22, %s188
        %s190 = ssub.s32 1, %s21
        %s191 = smul.u32 %s22, %s190
        %p192 = scmp.lt.s32.totalorder %s191, 0
        %s193 = scalar_select %p192, %s191, 0
        %s194 = smul.addr %s193, 2
        %s195 = scalar_lea.vmem %s1, %s194
        %s196 = ssub.s32 1, %s21
        %s197 = smul.u32 %s22, %s196
        %s198 = smul.u32 %s22, 2
        %p199 = scmp.eq.s32.totalorder %s21, 0
        %p200 = scmp.eq.s32.totalorder %s22, 0
        %p201 = pnand %p199, %p200
        %p202 = pneg %p201
        // Predicated region
        $region33: #{tpu_custom_call.1} parent=27 // pred_check
          _
        $region34: #{tpu_custom_call.1} parent=27 // pred_check_branch
          %204 = sbr.rel (%p201) target = $region36
        $region35: #{tpu_custom_call.1} parent=27 // pred_region
          %vm205 = vcmask 8192
          %206 = vst.msk [vmem:[#allocation4] sm:$0x1] %vm205, 0.0
          %vm207 = vcmask 0
          %208 = vst.msk [vmem:[#allocation5] sm:$0x1] %vm207, 0.0
          %209 = vst.msk [vmem:[#allocation6] sm:$0x1] %vm207, 0.0
        $region36: #{tpu_custom_call.1} parent=27 // pred_fallthru
          _
        // Predicated region
        $region37: #{tpu_custom_call.1} parent=27 // pred_check
          %p210 = pneg %p199
        $region38: #{tpu_custom_call.1} parent=27 // pred_check_branch
          %212 = sbr.rel (%p210) target = $region40
        $region39: #{tpu_custom_call.1} parent=27 // pred_region
          %v213 = vld [vmem:[%s166] sm:$0x3]
          %v214 = vld [vmem:[%s195] sm:$0x3]
          %v215 = vmul.f32 %v213, %v213
          %vm216 = vcmask 254976
          %v217 = vsel %vm216, %v215, 0.0
          %218 = vadd.xlane.f32.xlu0 %v217
          %v219 = vpop.xlane.xlu0 %218
          %v220 = vmax.f32 %v219, 1e-24
          %v221 = vrsqrt.pop %v220
          %v222 = vmul.f32 %v213, %v221
          %v223 = vmul.f32 %v214, %v214
          %v224 = vsel %vm216, %v223, 0.0
          %225 = vadd.xlane.f32.xlu0 %v224
          %v226 = vpop.xlane.xlu0 %225
          %v227 = vmax.f32 %v226, 1e-24
          %v228 = vrsqrt.pop %v227
          %v229 = vmul.f32 %v214, %v228
          %v230 = vld [vmem:[#allocation5] sm:$0x1]
          %v231 = vmul.f32 %v222, %v229
          %v232 = vsel %vm216, %v231, 0.0
          %233 = vadd.xlane.f32.xlu0 %v232
          %v234 = vpop.xlane.xlu0 %233
          %v235 = vrot.slane %v234, 4
          %v236 = vadd.f32 %v234, %v235
          %v237 = vrot.slane %v236, 2
          %v238 = vadd.f32 %v236, %v237
          %v239 = vrot.slane %v238, 1
          %v240 = vadd.f32 %v238, %v239
          %s241 = vtos %v240
          %v242 = vstv %s241
          %v243 = vadd.f32 %v230, %v242
          %vm244 = vcmask 0
          %245 = vst.msk [vmem:[#allocation5] sm:$0x1] %vm244, %v243
          %v246 = vmul.f32 %v222, 1.4142135
          %s247 = scalar_lea.vmem [#allocation2], %s198
          %248 = vst.msk [vmem:[%s247] sm:$0x3] %vm216, %v246
          %v249 = vmul.f32 %v229, 1.4142135
          %s250 = scalar_lea.vmem [#allocation3], %s198
          %251 = vst.msk [vmem:[%s250] sm:$0x3] %vm216, %v249
        $region40: #{tpu_custom_call.1} parent=27 // pred_fallthru
          _
        %p252 = scmp.eq.s32.totalorder %s21, 1
        // Predicated region
        $region41: #{tpu_custom_call.1} parent=27 // pred_check
          %p253 = pneg %p252
        $region42: #{tpu_custom_call.1} parent=27 // pred_check_branch
          %255 = sbr.rel (%p253) target = $region44
        $region43: #{tpu_custom_call.1} parent=27 // pred_region
          %s256 = scalar_lea.vmem [#allocation2], %s198
          %v257 = vld [vmem:[%s256] sm:$0x3]
          %s258 = scalar_lea.vmem [#allocation3], %s198
          %v259 = vld [vmem:[%s258] sm:$0x3]
          %v260 = vld [vmem:[#allocation2] sm:$0x3]
          %v261 = vld [vmem:[#allocation3] sm:$0x3]
          %v262 = vlaneseq
          %v263 = vshrl.u32 %v262, 7
          %v264 = vstv %s198
          %v265 = vadd.s32 %v263, %v264
          %v266 = vlaneseq
          %v267 = vand.u32 %v266, 127
          %vm268 = vcmp.eq.s32.totalorder %v265, %v267
          %vm269 = vcmask 261120
          %v271 = vsel %vm269, %v257, 0
          %v274 = vsel %vm269, %v260, 0
          %276 = vmatprep.subr.mxu0 0.0
          %277 = vmatpush1.xpose.msra.mxu0 %v274
          %278 = vmatprep.subr.mxu0 0.0
          %279 = vmatpush1.xpose.msra.mxu0 0.0
          %280 = vmatprep.subr.mxu0 0.0
          %281 = vmatpush1.xpose.msra.mxu0 0.0
          %282 = vmatprep.subr.mxu0 0.0
          %283 = vmatpush1.xpose.msra.mxu0 0.0
          %284 = vmatprep.subr.mxu0 0.0
          %285 = vmatpush1.xpose.msra.mxu0 0.0
          %286 = vmatprep.subr.mxu0 0.0
          %287 = vmatpush1.xpose.msra.mxu0 0.0
          %288 = vmatprep.subr.mxu0 0.0
          %289 = vmatpush1.xpose.msra.mxu0 0.0
          %290 = vmatprep.subr.mxu0 0.0
          %291 = vmatpush1.xpose.msra.mxu0 0.0
          %292 = vmatprep.subr.mxu0 0.0
          %293 = vmatpush1.xpose.msra.mxu0 0.0
          %294 = vmatprep.subr.mxu0 0.0
          %295 = vmatpush1.xpose.msra.mxu0 0.0
          %296 = vmatprep.subr.mxu0 0.0
          %297 = vmatpush1.xpose.msra.mxu0 0.0
          %298 = vmatprep.subr.mxu0 0.0
          %299 = vmatpush1.xpose.msra.mxu0 0.0
          %300 = vmatprep.subr.mxu0 0.0
          %301 = vmatpush1.xpose.msra.mxu0 0.0
          %302 = vmatprep.subr.mxu0 0.0
          %303 = vmatpush1.xpose.msra.mxu0 0.0
          %304 = vmatprep.subr.mxu0 0.0
          %305 = vmatpush1.xpose.msra.mxu0 0.0
          %306 = vmatprep.subr.mxu0 0.0
          %307 = vmatpush1.xpose.msra.mxu0 0.0
          %308 = vmatprep.subr.mxu0 0.0
          %309 = vmatpush1.xpose.msra.mxu0 0.0
          %310 = vmatprep.subr.mxu0 0.0
          %311 = vmatpush1.xpose.msra.mxu0 0.0
          %312 = vmatprep.subr.mxu0 0.0
          %313 = vmatpush1.xpose.msra.mxu0 0.0
          %314 = vmatprep.subr.mxu0 0.0
          %315 = vmatpush1.xpose.msra.mxu0 0.0
          %316 = vmatprep.subr.mxu0 0.0
          %317 = vmatpush1.xpose.msra.mxu0 0.0
          %318 = vmatprep.subr.mxu0 0.0
          %319 = vmatpush1.xpose.msra.mxu0 0.0
          %320 = vmatprep.subr.mxu0 0.0
          %321 = vmatpush1.xpose.msra.mxu0 0.0
          %322 = vmatprep.subr.mxu0 0.0
          %323 = vmatpush1.xpose.msra.mxu0 0.0
          %324 = vmatprep.subr.mxu0 0.0
          %325 = vmatpush1.xpose.msra.mxu0 0.0
          %326 = vmatprep.subr.mxu0 0.0
          %327 = vmatpush1.xpose.msra.mxu0 0.0
          %328 = vmatprep.subr.mxu0 0.0
          %329 = vmatpush1.xpose.msra.mxu0 0.0
          %330 = vmatprep.subr.mxu0 0.0
          %331 = vmatpush1.xpose.msra.mxu0 0.0
          %332 = vmatprep.subr.mxu0 0.0
          %333 = vmatpush1.xpose.msra.mxu0 0.0
          %334 = vmatprep.subr.mxu0 0.0
          %335 = vmatpush1.xpose.msra.mxu0 0.0
          %336 = vmatprep.subr.mxu0 0.0
          %337 = vmatpush1.xpose.msra.mxu0 0.0
          %338 = vmatprep.subr.mxu0 0.0
          %339 = vmatpush1.xpose.msra.mxu0 0.0
          %340 = vmatprep.mubr.f32.mxu0 0.0
          %341 = vmatmul.mubr.f32.gmra.mrb[0].mxu0 %v271
          %v342 = vpop.f32.mrb[0].mxu0
          %v343 = vadd.f32 0.0, %v342
          %v344 = vpop.f32.mrb[0].mxu0
          %345 = vdwg.mxu0
          %v346 = vsub.f32 %v343, 2.0
          %v347 = vmul.f32 %v346, 1.442695
          %v348 = vpow.pop %v347
          %v349 = vsel %vm268, 0.0, %v348
          %vm350 = vcmask 9216
          %v351 = vsel %vm350, %v349, 0.0
          %352 = vadd.xlane.f32.xlu0 %v351
          %v353 = vpop.xlane.xlu0 %352
          %v355 = vsel %vm269, %v261, 0
          %357 = vmatprep.subr.mxu0 0.0
          %358 = vmatpush1.xpose.msra.mxu0 %v355
          %359 = vmatprep.subr.mxu0 0.0
          %360 = vmatpush1.xpose.msra.mxu0 0.0
          %361 = vmatprep.subr.mxu0 0.0
          %362 = vmatpush1.xpose.msra.mxu0 0.0
          %363 = vmatprep.subr.mxu0 0.0
          %364 = vmatpush1.xpose.msra.mxu0 0.0
          %365 = vmatprep.subr.mxu0 0.0
          %366 = vmatpush1.xpose.msra.mxu0 0.0
          %367 = vmatprep.subr.mxu0 0.0
          %368 = vmatpush1.xpose.msra.mxu0 0.0
          %369 = vmatprep.subr.mxu0 0.0
          %370 = vmatpush1.xpose.msra.mxu0 0.0
          %371 = vmatprep.subr.mxu0 0.0
          %372 = vmatpush1.xpose.msra.mxu0 0.0
          %373 = vmatprep.subr.mxu0 0.0
          %374 = vmatpush1.xpose.msra.mxu0 0.0
          %375 = vmatprep.subr.mxu0 0.0
          %376 = vmatpush1.xpose.msra.mxu0 0.0
          %377 = vmatprep.subr.mxu0 0.0
          %378 = vmatpush1.xpose.msra.mxu0 0.0
          %379 = vmatprep.subr.mxu0 0.0
          %380 = vmatpush1.xpose.msra.mxu0 0.0
          %381 = vmatprep.subr.mxu0 0.0
          %382 = vmatpush1.xpose.msra.mxu0 0.0
          %383 = vmatprep.subr.mxu0 0.0
          %384 = vmatpush1.xpose.msra.mxu0 0.0
          %385 = vmatprep.subr.mxu0 0.0
          %386 = vmatpush1.xpose.msra.mxu0 0.0
          %387 = vmatprep.subr.mxu0 0.0
          %388 = vmatpush1.xpose.msra.mxu0 0.0
          %389 = vmatprep.subr.mxu0 0.0
          %390 = vmatpush1.xpose.msra.mxu0 0.0
          %391 = vmatprep.subr.mxu0 0.0
          %392 = vmatpush1.xpose.msra.mxu0 0.0
          %393 = vmatprep.subr.mxu0 0.0
          %394 = vmatpush1.xpose.msra.mxu0 0.0
          %395 = vmatprep.subr.mxu0 0.0
          %396 = vmatpush1.xpose.msra.mxu0 0.0
          %397 = vmatprep.subr.mxu0 0.0
          %398 = vmatpush1.xpose.msra.mxu0 0.0
          %399 = vmatprep.subr.mxu0 0.0
          %400 = vmatpush1.xpose.msra.mxu0 0.0
          %401 = vmatprep.subr.mxu0 0.0
          %402 = vmatpush1.xpose.msra.mxu0 0.0
          %403 = vmatprep.subr.mxu0 0.0
          %404 = vmatpush1.xpose.msra.mxu0 0.0
          %405 = vmatprep.subr.mxu0 0.0
          %406 = vmatpush1.xpose.msra.mxu0 0.0
          %407 = vmatprep.subr.mxu0 0.0
          %408 = vmatpush1.xpose.msra.mxu0 0.0
          %409 = vmatprep.subr.mxu0 0.0
          %410 = vmatpush1.xpose.msra.mxu0 0.0
          %411 = vmatprep.subr.mxu0 0.0
          %412 = vmatpush1.xpose.msra.mxu0 0.0
          %413 = vmatprep.subr.mxu0 0.0
          %414 = vmatpush1.xpose.msra.mxu0 0.0
          %415 = vmatprep.subr.mxu0 0.0
          %416 = vmatpush1.xpose.msra.mxu0 0.0
          %417 = vmatprep.subr.mxu0 0.0
          %418 = vmatpush1.xpose.msra.mxu0 0.0
          %419 = vmatprep.subr.mxu0 0.0
          %420 = vmatpush1.xpose.msra.mxu0 0.0
          %421 = vmatprep.mubr.f32.mxu0 0.0
          %422 = vmatmul.mubr.f32.gmra.mrb[0].mxu0 %v271
          %v423 = vpop.f32.mrb[0].mxu0
          %v424 = vadd.f32 0.0, %v423
          %v425 = vpop.f32.mrb[0].mxu0
          %426 = vdwg.mxu0
          %v427 = vsub.f32 %v424, 2.0
          %v428 = vmul.f32 %v427, 1.442695
          %v429 = vpow.pop %v428
          %v430 = vsel %vm350, %v429, 0.0
          %431 = vadd.xlane.f32.xlu0 %v430
          %v432 = vpop.xlane.xlu0 %431
          %v433 = vadd.f32 %v353, %v432
          %v434 = vld [vmem:[#allocation4] sm:$0x1]
          %v435 = vrot.slane %v430, 4
          %v436 = vadd.f32 %v430, %v435
          %v437 = vrot.slane %v436, 2
          %v438 = vadd.f32 %v436, %v437
          %v439 = vrot.slane %v438, 1
          %v440 = vadd.f32 %v438, %v439
          %v441 = vadd.f32 %v434, %v440
          %vm442 = vcmask 8192
          %443 = vst.msk [vmem:[#allocation4] sm:$0x1] %vm442, %v441
          %v445 = vsel %vm269, %v259, 0
          %447 = vmatprep.subr.mxu0 0.0
          %448 = vmatpush1.xpose.msra.mxu0 %v355
          %449 = vmatprep.subr.mxu0 0.0
          %450 = vmatpush1.xpose.msra.mxu0 0.0
          %451 = vmatprep.subr.mxu0 0.0
          %452 = vmatpush1.xpose.msra.mxu0 0.0
          %453 = vmatprep.subr.mxu0 0.0
          %454 = vmatpush1.xpose.msra.mxu0 0.0
          %455 = vmatprep.subr.mxu0 0.0
          %456 = vmatpush1.xpose.msra.mxu0 0.0
          %457 = vmatprep.subr.mxu0 0.0
          %458 = vmatpush1.xpose.msra.mxu0 0.0
          %459 = vmatprep.subr.mxu0 0.0
          %460 = vmatpush1.xpose.msra.mxu0 0.0
          %461 = vmatprep.subr.mxu0 0.0
          %462 = vmatpush1.xpose.msra.mxu0 0.0
          %463 = vmatprep.subr.mxu0 0.0
          %464 = vmatpush1.xpose.msra.mxu0 0.0
          %465 = vmatprep.subr.mxu0 0.0
          %466 = vmatpush1.xpose.msra.mxu0 0.0
          %467 = vmatprep.subr.mxu0 0.0
          %468 = vmatpush1.xpose.msra.mxu0 0.0
          %469 = vmatprep.subr.mxu0 0.0
          %470 = vmatpush1.xpose.msra.mxu0 0.0
          %471 = vmatprep.subr.mxu0 0.0
          %472 = vmatpush1.xpose.msra.mxu0 0.0
          %473 = vmatprep.subr.mxu0 0.0
          %474 = vmatpush1.xpose.msra.mxu0 0.0
          %475 = vmatprep.subr.mxu0 0.0
          %476 = vmatpush1.xpose.msra.mxu0 0.0
          %477 = vmatprep.subr.mxu0 0.0
          %478 = vmatpush1.xpose.msra.mxu0 0.0
          %479 = vmatprep.subr.mxu0 0.0
          %480 = vmatpush1.xpose.msra.mxu0 0.0
          %481 = vmatprep.subr.mxu0 0.0
          %482 = vmatpush1.xpose.msra.mxu0 0.0
          %483 = vmatprep.subr.mxu0 0.0
          %484 = vmatpush1.xpose.msra.mxu0 0.0
          %485 = vmatprep.subr.mxu0 0.0
          %486 = vmatpush1.xpose.msra.mxu0 0.0
          %487 = vmatprep.subr.mxu0 0.0
          %488 = vmatpush1.xpose.msra.mxu0 0.0
          %489 = vmatprep.subr.mxu0 0.0
          %490 = vmatpush1.xpose.msra.mxu0 0.0
          %491 = vmatprep.subr.mxu0 0.0
          %492 = vmatpush1.xpose.msra.mxu0 0.0
          %493 = vmatprep.subr.mxu0 0.0
          %494 = vmatpush1.xpose.msra.mxu0 0.0
          %495 = vmatprep.subr.mxu0 0.0
          %496 = vmatpush1.xpose.msra.mxu0 0.0
          %497 = vmatprep.subr.mxu0 0.0
          %498 = vmatpush1.xpose.msra.mxu0 0.0
          %499 = vmatprep.subr.mxu0 0.0
          %500 = vmatpush1.xpose.msra.mxu0 0.0
          %501 = vmatprep.subr.mxu0 0.0
          %502 = vmatpush1.xpose.msra.mxu0 0.0
          %503 = vmatprep.subr.mxu0 0.0
          %504 = vmatpush1.xpose.msra.mxu0 0.0
          %505 = vmatprep.subr.mxu0 0.0
          %506 = vmatpush1.xpose.msra.mxu0 0.0
          %507 = vmatprep.subr.mxu0 0.0
          %508 = vmatpush1.xpose.msra.mxu0 0.0
          %509 = vmatprep.subr.mxu0 0.0
          %510 = vmatpush1.xpose.msra.mxu0 0.0
          %511 = vmatprep.mubr.f32.mxu0 0.0
          %512 = vmatmul.mubr.f32.gmra.mrb[0].mxu0 %v445
          %v513 = vpop.f32.mrb[0].mxu0
          %v514 = vadd.f32 0.0, %v513
          %v515 = vpop.f32.mrb[0].mxu0
          %516 = vdwg.mxu0
          %v517 = vsub.f32 %v514, 2.0
          %v518 = vmul.f32 %v517, 1.442695
          %v519 = vpow.pop %v518
          %v520 = vsel %vm268, 0.0, %v519
          %v521 = vld [vmem:[#allocation4] sm:$0x1]
          %v522 = vsel %vm350, %v520, 0.0
          %v523 = vrot.slane %v522, 4
          %v524 = vadd.f32 %v522, %v523
          %v525 = vrot.slane %v524, 2
          %v526 = vadd.f32 %v524, %v525
          %v527 = vrot.slane %v526, 1
          %v528 = vadd.f32 %v526, %v527
          %v529 = vadd.f32 %v521, %v528
          %530 = vst.msk [vmem:[#allocation4] sm:$0x1] %vm442, %v529
          %v531 = vld [vmem:[#allocation6] sm:$0x1]
          %v532 = vmax.f32 %v433, 1e-30
          %v533 = vlog2.pop %v532
          %v534 = vmul.f32 %v533, 0.6931472
          %vm535 = vcmask 1024
          %v536 = vsel %vm535, %v534, 0.0
          %537 = vadd.xlane.f32.xlu0 %v536
          %v538 = vpop.xlane.xlu0 %537
          %v539 = vrot.slane %v538, 4
          %v540 = vadd.f32 %v538, %v539
          %v541 = vrot.slane %v540, 2
          %v542 = vadd.f32 %v540, %v541
          %v543 = vrot.slane %v542, 1
          %v544 = vadd.f32 %v542, %v543
          %s545 = vtos %v544
          %v546 = vstv %s545
          %v547 = vadd.f32 %v531, %v546
          %vm548 = vcmask 0
          %549 = vst.msk [vmem:[#allocation6] sm:$0x1] %vm548, %v547
          // Predicated region
          $region45: #{tpu_custom_call.1} parent=43 // pred_check
            %p550 = pneg %p200
          $region46: #{tpu_custom_call.1} parent=43 // pred_check_branch
            %552 = sbr.rel (%p550) target = $region48
          $region47: #{tpu_custom_call.1} parent=43 // pred_region
            %v553 = vld [vmem:[#allocation4] sm:$0x1]
            %v554 = vmax.f32 %v553, 1e-30
            %v555 = vlog2.pop %v554
            %v556 = vmul.f32 %v555, 0.6931472
            %v557 = vsel %vm442, %v556, 0.0
            %558 = vadd.xlane.f32.xlu0 %v557
            %v559 = vpop.xlane.xlu0 %558
            %v560 = vrot.slane %v559, 4
            %v561 = vadd.f32 %v559, %v560
            %v562 = vrot.slane %v561, 2
            %v563 = vadd.f32 %v561, %v562
            %v564 = vrot.slane %v563, 1
            %v565 = vadd.f32 %v563, %v564
            %s566 = vtos %v565
            %v567 = vld [vmem:[#allocation6] sm:$0x1]
            %v568 = vadd.f32 %v567, 8.0
            %v569 = vstv %s566
            %v570 = vadd.f32 %v568, %v569
            %v571 = vld [vmem:[#allocation5] sm:$0x1]
            %v572 = vmul.f32 %v571, 4.0
            %v573 = vsub.f32 %v570, %v572
            %v574 = vrcp.pop 4.0
            %v575 = vmul.f32 %v573, %v574
            %576 = vst.msk [vmem:[#allocation10] sm:$0x1] %vm548, %v575
          $region48: #{tpu_custom_call.1} parent=43 // pred_fallthru
            _
        $region44: #{tpu_custom_call.1} parent=27 // pred_fallthru
          _
        // Predicated region
        $region49: #{tpu_custom_call.1} parent=27 // pred_check
          %p577 = pneg %p102
        $region50: #{tpu_custom_call.1} parent=27 // pred_check_branch
          %579 = sbr.rel (%p577) target = $region52
        $region51: #{tpu_custom_call.1} parent=27 // pred_region
          %s581 = ssub.s32 16, 16
          %582 = vsyncadd [#allocation9], %s581
          %s584 = sshll.u32 [#allocation10], 4
          %s585 = int_to_ptr.vmem [resolvable:$true] %s584
          %587 = dma.vmem_to_hbm [thread:$0]  %s585, 16, %s2, [#allocation9]
        $region52: #{tpu_custom_call.1} parent=27 // pred_fallthru
          _
        // Predicated region
        $region53: #{tpu_custom_call.1} parent=27 // pred_check
          %p588 = pneg %p102
        $region54: #{tpu_custom_call.1} parent=27 // pred_check_branch
          %590 = sbr.rel (%p588) target = $region56
        $region55: #{tpu_custom_call.1} parent=27 // pred_region
          %591 = dma.done [#allocation9], 16
        $region56: #{tpu_custom_call.1} parent=27 // pred_fallthru
          _
      $region28: #{tpu_custom_call.1} parent=5 // pred_fallthru
        _
      %p592 = scmp.le.s32.totalorder 2, %s12
      // Predicated region
      $region57: #{tpu_custom_call.1} parent=5 // pred_check
        %p593 = pneg %p592
      $region58: #{tpu_custom_call.1} parent=5 // pred_check_branch
        %595 = sbr.rel (%p593) target = $region60
      $region59: #{tpu_custom_call.1} parent=5 // pred_region
        %s596 = ssub.s32 %s12, 2
      $region60: #{tpu_custom_call.1} parent=5 // pred_fallthru
        _
    $region6: #{tpu_custom_call.1} parent=1 // loop_footer
      %s16 = sadd.s32 1, %s12
    $region7: #{tpu_custom_call.1} parent=1 // loop_footer_branch
      %11 = sbr.rel target = $region3
    $region8: #{tpu_custom_call.1} parent=1 // loop_exit
      _
    %597 = vsyncpa [#allocation8], 1
    %s598 = scalar_lea.sflag [#allocation8], 1
    %599 = vsyncpa %s598, 1
    %600 = vsyncpa [#allocation9], 1
    %s601 = scalar_lea.sflag [#allocation9], 1
    %602 = vsyncpa %s601, 1

</llo_original>
